<compile_context>
chip_gen: v5e
topology: v5e:2x2
jax: 0.10.0
libtpu: 0.0.40
codegen_flags: <defaults>
</compile_context>

<pallas_src>
import functools
import math

import jax
import jax.numpy as jnp
from jax.experimental import pallas as pl
from jax.experimental.pallas import tpu as pltpu


def _round_up(x, m):
    return ((x + m - 1) // m) * m


def _mlp_edge_kernel(x_ref, w_ref, b_ref, out_ref):
    # Single fused matmul: x_tile @ W_eff (f32 MXU accumulation), then + bias.
    acc = jnp.dot(x_ref[...], w_ref[...], preferred_element_type=jnp.float32)
    out_ref[...] = (acc + b_ref[...]).astype(out_ref.dtype)


@functools.partial(jax.jit, static_argnames=("compute_dtype", "tile_e"))
def mlp_edge_score(e_feat, u_feat, v_feat, src, dst, weight, bias, *,
                   compute_dtype=jnp.bfloat16, tile_e=32768):
    """Pallas implementation of MLP.forward.

    e_feat: [E, De]   edge features ('h' on forward edges)
    u_feat: [Nu, Du]  source-node features
    v_feat: [Nv, Dv]  dest-node features
    src, dst: [E] int32 edge endpoint indices
    weight: [O, De+Du+Dv]  (PyTorch nn.Linear layout), bias: [O]
    returns: [E, O] (f32 for f32 inputs; accumulation is always f32)
    """
    E, De = e_feat.shape
    Du = u_feat.shape[1]
    Dv = v_feat.shape[1]
    K = De + Du + Dv
    O = weight.shape[0]

    out_dtype = jnp.result_type(e_feat.dtype, u_feat.dtype, v_feat.dtype,
                                weight.dtype)
    if E == 0:                                   # degenerate-graph guard
        return jnp.zeros((0, O), out_dtype)

    compute_dtype = jnp.dtype(compute_dtype)
    itemsize = compute_dtype.itemsize
    sub = 32 // itemsize                         # sublane packing: f32=8, bf16=16

    # --- Lane-dense row grouping -------------------------------------------
    # Choose GROUP so GROUP*O and GROUP*K are multiples of 128 (full lane width
    # for both loads and stores).
    g_o = 128 // math.gcd(128, O)
    g_k = 128 // math.gcd(128, K)
    group = (g_o * g_k) // math.gcd(g_o, g_k)    # lcm
    if group * group * K * O * itemsize > (8 << 20):
        group = g_o                              # keep STORES lane-dense (GO%128==0)
    GK, GO = group * K, group * O

    # Pad edges only to the minimal alignment (<= align-1 wasted rows), not to
    # a full tile; the last grid block may be partial.
    align = sub * group
    E_pad = _round_up(E, align)

    # Glue: gather endpoint features and fuse the concat into ONE input array.
    # allow_input_fusion below lets XLA fuse this producer into the kernel's
    # input DMA instead of bouncing x through HBM twice.
    x = jnp.concatenate(
        [e_feat.astype(compute_dtype),
         jnp.take(u_feat, src, axis=0).astype(compute_dtype),
         jnp.take(v_feat, dst, axis=0).astype(compute_dtype)],
        axis=-1)                                             # [E, K]
    if E_pad != E:
        x = jnp.pad(x, ((0, E_pad - E), (0, 0)))

    rows = E_pad // group                                    # grouped rows
    x_eff = x.reshape(rows, GK)                              # contiguous view

    w_t = weight.astype(compute_dtype).T                     # [K, O]
    if group > 1:
        # Block-diagonal weight: GROUP copies of W^T on the diagonal, so one
        # grouped row @ W_eff yields GROUP independent edge scores (exact).
        w_eff = jnp.kron(jnp.eye(group, dtype=compute_dtype), w_t)  # [GK, GO]
        b_eff = jnp.tile(bias.astype(jnp.float32), group).reshape(1, GO)
    else:
        w_eff = w_t
        b_eff = bias.astype(jnp.float32).reshape(1, O)

    # --- Edge-dimension tiling ---------------------------------------------
    # Big tiles (amortize ~0.35us/step pipeline overhead), but cap so the grid
    # has >= 2 steps when possible (v7x: 2 TensorCores on the parallel axis).
    tile_g = max(sub, (tile_e // group) // sub * sub)        # target rows/step
    half = _round_up(-(-rows // 2), sub)                     # ceil(rows/2), aligned
    tile_g = min(tile_g, half)
    n_steps = -(-rows // tile_g)                             # cdiv; last may be partial
    grid = (n_steps,)

    out_itemsize = jnp.dtype(out_dtype).itemsize
    cost = pl.CostEstimate(
        flops=2 * rows * GK * GO,
        transcendentals=0,
        bytes_accessed=(x_eff.size * itemsize + w_eff.size * itemsize
                        + b_eff.size * 4 + rows * GO * out_itemsize))

    out = pl.pallas_call(
        _mlp_edge_kernel,
        out_shape=jax.ShapeDtypeStruct((rows, GO), out_dtype),
        grid_spec=pltpu.PrefetchScalarGridSpec(
            num_scalar_prefetch=0,
            grid=grid,
            in_specs=[
                pl.BlockSpec((tile_g, GK), lambda i: (i, 0)),   # fused features
                pl.BlockSpec((GK, GO), lambda i: (0, 0)),       # block-diag W^T
                pl.BlockSpec((1, GO), lambda i: (0, 0)),        # tiled bias (f32)
            ],
            out_specs=pl.BlockSpec((tile_g, GO), lambda i: (i, 0)),
        ),
        compiler_params=pltpu.CompilerParams(
            dimension_semantics=("parallel",),
            vmem_limit_bytes=32 * 1024 * 1024,
            # Let XLA fuse the cast/concat/pad/reshape producer of x into the
            # kernel input (weights/bias are tiny, keep them materialized).
            allow_input_fusion=[True, False, False],
        ),
        cost_estimate=cost,
    )(x_eff, w_eff, b_eff)

    # Ungroup (pure reshape of contiguous data) and drop padded edges.
    return out.reshape(E_pad, O)[:E]


def _reference(e_feat, u_feat, v_feat, src, dst, weight, bias):
    return jnp.concatenate(
        [e_feat, u_feat[src], v_feat[dst]], axis=-1) @ weight.T + bias


if __name__ == "__main__":
    key = jax.random.PRNGKey(0)
    k1, k2, k3, k4, k5, k6, k7, k8 = jax.random.split(key, 8)

    # Small synthetic heterograph: Nu source nodes, Nv dest nodes, E edges.
    Nu, Nv = 8, 8
    De, Du, Dv = 8, 8, 16          # in_dim = De + Du + Dv = 32
    out_dim = 8
    in_dim = De + Du + Dv

    u_feat = jax.random.normal(k2, (Nu, Du), dtype=jnp.float32)
    v_feat = jax.random.normal(k3, (Nv, Dv), dtype=jnp.float32)

    # Deterministic nn.Linear(in_dim, out_dim) parameters (PyTorch layout).
    bound = 1.0 / (in_dim ** 0.5)
    weight = jax.random.uniform(k6, (out_dim, in_dim), jnp.float32,
                                -bound, bound)
    bias = jax.random.uniform(k7, (out_dim,), jnp.float32, -bound, bound)

    ok = True
    for E in (16, 37):             # aligned and ragged edge counts
        ke, ks, kd = jax.random.split(jax.random.fold_in(k8, E), 3)
        e_feat = jax.random.normal(ke, (E, De), dtype=jnp.float32)
        src = jax.random.randint(ks, (E,), 0, Nu, dtype=jnp.int32)
        dst = jax.random.randint(kd, (E,), 0, Nv, dtype=jnp.int32)

        ref = _reference(e_feat, u_feat, v_feat, src, dst, weight, bias)

        # Exact f32 compute path (matches PyTorch numerics tightly).
        s_f32 = jax.block_until_ready(
            mlp_edge_score(e_feat, u_feat, v_feat, src, dst, weight, bias,
                           compute_dtype=jnp.float32))
        ok &= s_f32.shape == (E, out_dim)
        ok &= bool(jnp.allclose(s_f32, ref, atol=1e-4, rtol=1e-4))

        # Default fast path: bf16 inputs/weights, f32 accumulation + f32 bias.
        s_bf16 = jax.block_until_ready(
            mlp_edge_score(e_feat, u_feat, v_feat, src, dst, weight, bias))
        ok &= s_bf16.shape == (E, out_dim)
        ok &= bool(jnp.allclose(s_bf16, ref, atol=2e-2, rtol=2e-2))

    assert ok
    print("KERNEL_OK")
</pallas_src>

<mosaic_0001>
module attributes {stable_mosaic.version = 11 : i64} {
  func.func @_mlp_edge_kernel(%arg0: i32, %arg1: memref<8x512xf32, #tpu.memory_space<vmem>>, %arg2: memref<512x128xf32, #tpu.memory_space<vmem>>, %arg3: memref<1x128xf32, #tpu.memory_space<vmem>>, %arg4: memref<8x128xf32, #tpu.memory_space<vmem>>) attributes {dimension_semantics = [#tpu.dimension_semantics<parallel>], iteration_bounds = array<i64: 1>, scalar_prefetch = 0 : i64, scratch_operands = 0 : i64, tpu.core_type = #tpu.core_type<tc>, window_params = [{transform_indices = @transform_0, window_bounds = array<i64: 8, 512>}, {pipeline_mode = #tpu.pipeline_mode<synchronous>, transform_indices = @transform_1, window_bounds = array<i64: 512, 128>}, {pipeline_mode = #tpu.pipeline_mode<synchronous>, transform_indices = @transform_2, window_bounds = array<i64: 1, 128>}, {transform_indices = @transform_3, window_bounds = array<i64: 8, 128>}]} {
    %c0 = arith.constant 0 : index
    %c0_0 = arith.constant 0 : index
    %0 = vector.load %arg1[%c0, %c0_0] : memref<8x512xf32, #tpu.memory_space<vmem>>, vector<8x512xf32>
    %c0_1 = arith.constant 0 : index
    %c0_2 = arith.constant 0 : index
    %1 = vector.load %arg2[%c0_1, %c0_2] : memref<512x128xf32, #tpu.memory_space<vmem>>, vector<512x128xf32>
    %cst = arith.constant dense<0.000000e+00> : vector<8x128xf32>
    %2 = tpu.matmul %0, %1, %cst {dimension_numbers = #tpu.dot_dimension_numbers<[1], [0], [0], [1], [0, 0, 1, 1], [], []>} : vector<8x512xf32>, vector<512x128xf32>, vector<8x128xf32> -> vector<8x128xf32>
    %c0_3 = arith.constant 0 : index
    %c0_4 = arith.constant 0 : index
    %3 = vector.load %arg3[%c0_3, %c0_4] : memref<1x128xf32, #tpu.memory_space<vmem>>, vector<1x128xf32>
    %4 = vector.broadcast %3 : vector<1x128xf32> to vector<8x128xf32>
    %5 = arith.addf %2, %4 : vector<8x128xf32>
    %c0_5 = arith.constant 0 : index
    %c0_6 = arith.constant 0 : index
    %6 = vector.load %arg4[%c0_5, %c0_6] : memref<8x128xf32, #tpu.memory_space<vmem>>, vector<8x128xf32>
    tpu.vector_store %arg4[%c0_5, %c0_6], %5 {strides = array<i32>} : memref<8x128xf32, #tpu.memory_space<vmem>>, vector<8x128xf32>,
    return
  }
  func.func @transform_0(%arg0: i32) -> (i32, i32) {
    %c0_i32 = arith.constant 0 : i32
    %c0_i32_0 = arith.constant 0 : i32
    return %arg0, %c0_i32 : i32, i32
  }
  func.func @transform_1(%arg0: i32) -> (i32, i32) {
    %c0_i32 = arith.constant 0 : i32
    %c0_i32_0 = arith.constant 0 : i32
    %c0_i32_1 = arith.constant 0 : i32
    return %c0_i32, %c0_i32_0 : i32, i32
  }
  func.func @transform_2(%arg0: i32) -> (i32, i32) {
    %c0_i32 = arith.constant 0 : i32
    %c0_i32_0 = arith.constant 0 : i32
    %c0_i32_1 = arith.constant 0 : i32
    return %c0_i32, %c0_i32_0 : i32, i32
  }
  func.func @transform_3(%arg0: i32) -> (i32, i32) {
    %c0_i32 = arith.constant 0 : i32
    %c0_i32_0 = arith.constant 0 : i32
    return %arg0, %c0_i32 : i32, i32
  }
}

</mosaic_0001>

<llo_original>
// kernel: tile.8
$region0: #{tile.8}
  #allocation0 [shape = 's32[1]{0}', space=sflag, size = 0x4, scoped, tag = 'scoped memory for tile.8']
  %s0 = inlined_call_operand.vmem [shape: f32[8], index: 0, kind: input, shape index: {}]
  %s1 = inlined_call_operand.vmem [shape: f32[16,8], index: 1, kind: output, shape index: {}]
  // Predicated region
  $region2: #{tile.8} parent=0 // pred_check
    _
  $region3: #{tile.8} parent=0 // pred_check_branch
    %3 = sbr.rel (0) target = $region5
  $region4: #{tile.8} parent=0 // pred_region
    _
  $region5: #{tile.8} parent=0 // pred_fallthru
    _
  %v4 = vld [vmem:[%s0] ss:$0 sm:$0xff]
  %5 = vst [vmem:[%s1] sm:$0xff] %v4
  %s6 = scalar_lea.vmem %s1, 8
  %7 = vst [vmem:[%s6] sm:$0xff] %v4

// kernel: tile.9
$region0: #{tile.9}
  %s0 = inlined_call_operand.vmem [shape: f32[16,8], index: 0, kind: input, shape index: {}]
  %s1 = inlined_call_operand.vmem [shape: f32[1,128], index: 1, kind: output, shape index: {}]
  $region1: #{tile.9} parent=0
    #allocation0 [shape = 'u8[4096]{0}', space=vmem, size = 0x1000, scoped, tag = 'scoped mem for output reshape']
    %v2 = vld [vmem:[%s0] sm:$0x1]
    %vm3 = vcmask 64512
    %4 = vst.msk [vmem:[#allocation0] sm:$0x1] %vm3, %v2
    %s5 = scalar_lea.vmem %s0, 15
    %v6 = vld [vmem:[%s5] sm:$0x1]
    %7 = vrot.lane.b32.xlu0 %v6, 120
    %v8 = vpop.permute.xlu0 %7
    %vm9 = vcmask 1048512
    %10 = vst.msk [vmem:[#allocation0] sm:$0x1] %vm9, %v8
    %s11 = scalar_lea.vmem %s0, 14
    %v12 = vld [vmem:[%s11] sm:$0x1]
    %13 = vrot.lane.b32.xlu0 %v12, 112
    %v14 = vpop.permute.xlu0 %13
    %vm15 = vcmask 982912
    %16 = vst.msk [vmem:[#allocation0] sm:$0x1] %vm15, %v14
    %s17 = scalar_lea.vmem %s0, 13
    %v18 = vld [vmem:[%s17] sm:$0x1]
    %19 = vrot.lane.b32.xlu0 %v18, 104
    %v20 = vpop.permute.xlu0 %19
    %vm21 = vcmask 917312
    %22 = vst.msk [vmem:[#allocation0] sm:$0x1] %vm21, %v20
    %s23 = scalar_lea.vmem %s0, 12
    %v24 = vld [vmem:[%s23] sm:$0x1]
    %25 = vrot.lane.b32.xlu0 %v24, 96
    %v26 = vpop.permute.xlu0 %25
    %vm27 = vcmask 851712
    %28 = vst.msk [vmem:[#allocation0] sm:$0x1] %vm27, %v26
    %s29 = scalar_lea.vmem %s0, 11
    %v30 = vld [vmem:[%s29] sm:$0x1]
    %31 = vrot.lane.b32.xlu0 %v30, 88
    %v32 = vpop.permute.xlu0 %31
    %vm33 = vcmask 786112
    %34 = vst.msk [vmem:[#allocation0] sm:$0x1] %vm33, %v32
    %s35 = scalar_lea.vmem %s0, 10
    %v36 = vld [vmem:[%s35] sm:$0x1]
    %37 = vrot.lane.b32.xlu0 %v36, 80
    %v38 = vpop.permute.xlu0 %37
    %vm39 = vcmask 720512
    %40 = vst.msk [vmem:[#allocation0] sm:$0x1] %vm39, %v38
    %s41 = scalar_lea.vmem %s0, 9
    %v42 = vld [vmem:[%s41] sm:$0x1]
    %43 = vrot.lane.b32.xlu0 %v42, 72
    %v44 = vpop.permute.xlu0 %43
    %vm45 = vcmask 654912
    %46 = vst.msk [vmem:[#allocation0] sm:$0x1] %vm45, %v44
    %s47 = scalar_lea.vmem %s0, 8
    %v48 = vld [vmem:[%s47] sm:$0x1]
    %49 = vrot.lane.b32.xlu0 %v48, 64
    %v50 = vpop.permute.xlu0 %49
    %vm51 = vcmask 589312
    %52 = vst.msk [vmem:[#allocation0] sm:$0x1] %vm51, %v50
    %s53 = scalar_lea.vmem %s0, 7
    %v54 = vld [vmem:[%s53] sm:$0x1]
    %55 = vrot.lane.b32.xlu0 %v54, 56
    %v56 = vpop.permute.xlu0 %55
    %vm57 = vcmask 523712
    %58 = vst.msk [vmem:[#allocation0] sm:$0x1] %vm57, %v56
    %s59 = scalar_lea.vmem %s0, 6
    %v60 = vld [vmem:[%s59] sm:$0x1]
    %61 = vrot.lane.b32.xlu0 %v60, 48
    %v62 = vpop.permute.xlu0 %61
    %vm63 = vcmask 458112
    %64 = vst.msk [vmem:[#allocation0] sm:$0x1] %vm63, %v62
    %s65 = scalar_lea.vmem %s0, 5
    %v66 = vld [vmem:[%s65] sm:$0x1]
    %67 = vrot.lane.b32.xlu0 %v66, 40
    %v68 = vpop.permute.xlu0 %67
    %vm69 = vcmask 392512
    %70 = vst.msk [vmem:[#allocation0] sm:$0x1] %vm69, %v68
    %s71 = scalar_lea.vmem %s0, 4
    %v72 = vld [vmem:[%s71] sm:$0x1]
    %73 = vrot.lane.b32.xlu0 %v72, 32
    %v74 = vpop.permute.xlu0 %73
    %vm75 = vcmask 326912
    %76 = vst.msk [vmem:[#allocation0] sm:$0x1] %vm75, %v74
    %s77 = scalar_lea.vmem %s0, 3
    %v78 = vld [vmem:[%s77] sm:$0x1]
    %79 = vrot.lane.b32.xlu0 %v78, 24
    %v80 = vpop.permute.xlu0 %79
    %vm81 = vcmask 261312
    %82 = vst.msk [vmem:[#allocation0] sm:$0x1] %vm81, %v80
    %s83 = scalar_lea.vmem %s0, 2
    %v84 = vld [vmem:[%s83] sm:$0x1]
    %85 = vrot.lane.b32.xlu0 %v84, 16
    %v86 = vpop.permute.xlu0 %85
    %vm87 = vcmask 195712
    %88 = vst.msk [vmem:[#allocation0] sm:$0x1] %vm87, %v86
    %s89 = scalar_lea.vmem %s0, 1
    %v90 = vld [vmem:[%s89] sm:$0x1]
    %91 = vrot.lane.b32.xlu0 %v90, 8
    %v92 = vpop.permute.xlu0 %91
    %vm93 = vcmask 130112
    %94 = vst.msk [vmem:[#allocation0] sm:$0x1] %vm93, %v92
    %s96 = ssub.s32 2, 1
    %v97 = vld [vmem:[#allocation0] sm:%s96]
    %s99 = ssub.s32 2, 1
    %100 = vst [vmem:[%s1] sm:%s99] %v97

// kernel: mlp_edge_score.1
$region0: #{mlp_edge_score.1}
  #allocation0 [shape = 'u32[]', space=smem, size = 0x4, offset = 0x4, fixed_abs, tag = 'smem constant byte address 0x4 - core index']
  #allocation1 [shape = 'u32[72,128]{1,0:T(1,128)}', space=vmem, size = 0x9000, scoped, tag = 'internal scratch']
  %s0 = inlined_call_operand.vmem [shape: f32[8,512], index: 0, kind: input, shape index: {}]
  %s1 = inlined_call_operand.vmem [shape: f32[512,128], index: 1, kind: input, shape index: {}]
  %s2 = inlined_call_operand.vmem [shape: f32[1,128], index: 2, kind: input, shape index: {}]
  %s3 = inlined_call_operand.vmem [shape: f32[8,128], index: 3, kind: output, shape index: {}]
  %s4 = sld [smem:[#allocation0]]
  $region22: #{mlp_edge_score.1} parent=0
    _
  %s6 = ssub.s32 1, %s4
  %s7 = scalar_select 0, %s6, %s4
  // Predicated region
  $region2: #{mlp_edge_score.1} parent=0 // pred_check
    _
  $region3: #{mlp_edge_score.1} parent=0 // pred_check_branch
    %9 = sbr.rel (0) target = $region5
  $region4: #{mlp_edge_score.1} parent=0 // pred_region
    _
  $region5: #{mlp_edge_score.1} parent=0 // pred_fallthru
    _
  // Predicated region
  $region6: #{mlp_edge_score.1} parent=0 // pred_check
    _
  $region7: #{mlp_edge_score.1} parent=0 // pred_check_branch
    %11 = sbr.rel (0) target = $region9
  $region8: #{mlp_edge_score.1} parent=0 // pred_region
    _
  $region9: #{mlp_edge_score.1} parent=0 // pred_fallthru
    _
  // Predicated region
  $region10: #{mlp_edge_score.1} parent=0 // pred_check
    _
  $region11: #{mlp_edge_score.1} parent=0 // pred_check_branch
    %13 = sbr.rel (0) target = $region13
  $region12: #{mlp_edge_score.1} parent=0 // pred_region
    _
  $region13: #{mlp_edge_score.1} parent=0 // pred_fallthru
    _
  %v14 = vld [vmem:[%s0] sm:$0xff]
  %v15 = vld [vmem:[%s0 + $0x8] sm:$0xff]
  %v16 = vld [vmem:[%s0 + $0x10] sm:$0xff]
  %v17 = vld [vmem:[%s0 + $0x18] sm:$0xff]
  %v18 = vld [vmem:[%s1] sm:$0xff]
  %v19 = vld [vmem:[%s1 + $0x8] sm:$0xff]
  %v20 = vld [vmem:[%s1 + $0x10] sm:$0xff]
  %v21 = vld [vmem:[%s1 + $0x18] sm:$0xff]
  %v22 = vld [vmem:[%s1 + $0x20] sm:$0xff]
  %v23 = vld [vmem:[%s1 + $0x28] sm:$0xff]
  %v24 = vld [vmem:[%s1 + $0x30] sm:$0xff]
  %v25 = vld [vmem:[%s1 + $0x38] sm:$0xff]
  %v26 = vld [vmem:[%s1 + $0x40] sm:$0xff]
  %v27 = vld [vmem:[%s1 + $0x48] sm:$0xff]
  %v28 = vld [vmem:[%s1 + $0x50] sm:$0xff]
  %v29 = vld [vmem:[%s1 + $0x58] sm:$0xff]
  %v30 = vld [vmem:[%s1 + $0x60] sm:$0xff]
  %v31 = vld [vmem:[%s1 + $0x68] sm:$0xff]
  %v32 = vld [vmem:[%s1 + $0x70] sm:$0xff]
  %v33 = vld [vmem:[%s1 + $0x78] sm:$0xff]
  %v34 = vld [vmem:[%s1 + $0x80] sm:$0xff]
  %v35 = vld [vmem:[%s1 + $0x88] sm:$0xff]
  %v36 = vld [vmem:[%s1 + $0x90] sm:$0xff]
  %v37 = vld [vmem:[%s1 + $0x98] sm:$0xff]
  %v38 = vld [vmem:[%s1 + $0xa0] sm:$0xff]
  %v39 = vld [vmem:[%s1 + $0xa8] sm:$0xff]
  %v40 = vld [vmem:[%s1 + $0xb0] sm:$0xff]
  %v41 = vld [vmem:[%s1 + $0xb8] sm:$0xff]
  %v42 = vld [vmem:[%s1 + $0xc0] sm:$0xff]
  %v43 = vld [vmem:[%s1 + $0xc8] sm:$0xff]
  %v44 = vld [vmem:[%s1 + $0xd0] sm:$0xff]
  %v45 = vld [vmem:[%s1 + $0xd8] sm:$0xff]
  %v46 = vld [vmem:[%s1 + $0xe0] sm:$0xff]
  %v47 = vld [vmem:[%s1 + $0xe8] sm:$0xff]
  %v48 = vld [vmem:[%s1 + $0xf0] sm:$0xff]
  %v49 = vld [vmem:[%s1 + $0xf8] sm:$0xff]
  %v50 = vld [vmem:[%s1 + $0x100] sm:$0xff]
  %v51 = vld [vmem:[%s1 + $0x108] sm:$0xff]
  %v52 = vld [vmem:[%s1 + $0x110] sm:$0xff]
  %v53 = vld [vmem:[%s1 + $0x118] sm:$0xff]
  %v54 = vld [vmem:[%s1 + $0x120] sm:$0xff]
  %v55 = vld [vmem:[%s1 + $0x128] sm:$0xff]
  %v56 = vld [vmem:[%s1 + $0x130] sm:$0xff]
  %v57 = vld [vmem:[%s1 + $0x138] sm:$0xff]
  %v58 = vld [vmem:[%s1 + $0x140] sm:$0xff]
  %v59 = vld [vmem:[%s1 + $0x148] sm:$0xff]
  %v60 = vld [vmem:[%s1 + $0x150] sm:$0xff]
  %v61 = vld [vmem:[%s1 + $0x158] sm:$0xff]
  %v62 = vld [vmem:[%s1 + $0x160] sm:$0xff]
  %v63 = vld [vmem:[%s1 + $0x168] sm:$0xff]
  %v64 = vld [vmem:[%s1 + $0x170] sm:$0xff]
  %v65 = vld [vmem:[%s1 + $0x178] sm:$0xff]
  %v66 = vld [vmem:[%s1 + $0x180] sm:$0xff]
  %v67 = vld [vmem:[%s1 + $0x188] sm:$0xff]
  %v68 = vld [vmem:[%s1 + $0x190] sm:$0xff]
  %v69 = vld [vmem:[%s1 + $0x198] sm:$0xff]
  %v70 = vld [vmem:[%s1 + $0x1a0] sm:$0xff]
  %v71 = vld [vmem:[%s1 + $0x1a8] sm:$0xff]
  %v72 = vld [vmem:[%s1 + $0x1b0] sm:$0xff]
  %v73 = vld [vmem:[%s1 + $0x1b8] sm:$0xff]
  %v74 = vld [vmem:[%s1 + $0x1c0] sm:$0xff]
  %v75 = vld [vmem:[%s1 + $0x1c8] sm:$0xff]
  %v76 = vld [vmem:[%s1 + $0x1d0] sm:$0xff]
  %v77 = vld [vmem:[%s1 + $0x1d8] sm:$0xff]
  %v78 = vld [vmem:[%s1 + $0x1e0] sm:$0xff]
  %v79 = vld [vmem:[%s1 + $0x1e8] sm:$0xff]
  %v80 = vld [vmem:[%s1 + $0x1f0] sm:$0xff]
  %v81 = vld [vmem:[%s1 + $0x1f8] sm:$0xff]
  %v82 = vld [vmem:[%s2] sm:$0x1]
  %v84 = vperm.slane %v82, 0
  %86 = vmatpush.msra.mxu0 %v33
  %87 = vmatpush.msra.mxu0 %v32
  %88 = vmatpush.msra.mxu0 %v31
  %89 = vmatpush.msra.mxu0 %v30
  %90 = vmatpush.msra.mxu0 %v29
  %91 = vmatpush.msra.mxu0 %v28
  %92 = vmatpush.msra.mxu0 %v27
  %93 = vmatpush.msra.mxu0 %v26
  %94 = vmatpush.msra.mxu0 %v25
  %95 = vmatpush.msra.mxu0 %v24
  %96 = vmatpush.msra.mxu0 %v23
  %97 = vmatpush.msra.mxu0 %v22
  %98 = vmatpush.msra.mxu0 %v21
  %99 = vmatpush.msra.mxu0 %v20
  %100 = vmatpush.msra.mxu0 %v19
  %101 = vmatpush.msra.mxu0 %v18
  %102 = vmatmul.f32.gmra.mxu0 %v14
  %v103 = vpop.f32.mrf.mxu0
  %v104 = vadd.f32 %v84, %v103
  %105 = vdwg.mxu0
  %106 = vmatpush.msra.mxu0 %v49
  %107 = vmatpush.msra.mxu0 %v48
  %108 = vmatpush.msra.mxu0 %v47
  %109 = vmatpush.msra.mxu0 %v46
  %110 = vmatpush.msra.mxu0 %v45
  %111 = vmatpush.msra.mxu0 %v44
  %112 = vmatpush.msra.mxu0 %v43
  %113 = vmatpush.msra.mxu0 %v42
  %114 = vmatpush.msra.mxu0 %v41
  %115 = vmatpush.msra.mxu0 %v40
  %116 = vmatpush.msra.mxu0 %v39
  %117 = vmatpush.msra.mxu0 %v38
  %118 = vmatpush.msra.mxu0 %v37
  %119 = vmatpush.msra.mxu0 %v36
  %120 = vmatpush.msra.mxu0 %v35
  %121 = vmatpush.msra.mxu0 %v34
  %122 = vmatmul.f32.gmra.mxu0 %v15
  %v123 = vpop.f32.mrf.mxu0
  %v124 = vadd.f32 %v104, %v123
  %125 = vdwg.mxu0
  %126 = vmatpush.msra.mxu0 %v65
  %127 = vmatpush.msra.mxu0 %v64
  %128 = vmatpush.msra.mxu0 %v63
  %129 = vmatpush.msra.mxu0 %v62
  %130 = vmatpush.msra.mxu0 %v61
  %131 = vmatpush.msra.mxu0 %v60
  %132 = vmatpush.msra.mxu0 %v59
  %133 = vmatpush.msra.mxu0 %v58
  %134 = vmatpush.msra.mxu0 %v57
  %135 = vmatpush.msra.mxu0 %v56
  %136 = vmatpush.msra.mxu0 %v55
  %137 = vmatpush.msra.mxu0 %v54
  %138 = vmatpush.msra.mxu0 %v53
  %139 = vmatpush.msra.mxu0 %v52
  %140 = vmatpush.msra.mxu0 %v51
  %141 = vmatpush.msra.mxu0 %v50
  %142 = vmatmul.f32.gmra.mxu0 %v16
  %v143 = vpop.f32.mrf.mxu0
  %v144 = vadd.f32 %v124, %v143
  %145 = vdwg.mxu0
  %146 = vmatpush.msra.mxu0 %v81
  %147 = vmatpush.msra.mxu0 %v80
  %148 = vmatpush.msra.mxu0 %v79
  %149 = vmatpush.msra.mxu0 %v78
  %150 = vmatpush.msra.mxu0 %v77
  %151 = vmatpush.msra.mxu0 %v76
  %152 = vmatpush.msra.mxu0 %v75
  %153 = vmatpush.msra.mxu0 %v74
  %154 = vmatpush.msra.mxu0 %v73
  %155 = vmatpush.msra.mxu0 %v72
  %156 = vmatpush.msra.mxu0 %v71
  %157 = vmatpush.msra.mxu0 %v70
  %158 = vmatpush.msra.mxu0 %v69
  %159 = vmatpush.msra.mxu0 %v68
  %160 = vmatpush.msra.mxu0 %v67
  %161 = vmatpush.msra.mxu0 %v66
  %162 = vmatmul.f32.gmra.mxu0 %v17
  %v163 = vpop.f32.mrf.mxu0
  %v164 = vadd.f32 %v144, %v163
  %165 = vdwg.mxu0
  %166 = vst [vmem:[%s3] sm:$0xff] %v164
  // Predicated region
  $region14: #{mlp_edge_score.1} parent=0 // pred_check
    _
  $region15: #{mlp_edge_score.1} parent=0 // pred_check_branch
    %168 = sbr.rel (0) target = $region17
  $region16: #{mlp_edge_score.1} parent=0 // pred_region
    _
  $region17: #{mlp_edge_score.1} parent=0 // pred_fallthru
    _
  // Predicated region
  $region18: #{mlp_edge_score.1} parent=0 // pred_check
    _
  $region19: #{mlp_edge_score.1} parent=0 // pred_check_branch
    %170 = sbr.rel (0) target = $region21
  $region20: #{mlp_edge_score.1} parent=0 // pred_region
    _
  $region21: #{mlp_edge_score.1} parent=0 // pred_fallthru
    _

</llo_original>
